<compile_context>
chip_gen: v7x
topology: tpu7x:2x2x1
jax: 0.10.0
libtpu: 0.0.40
codegen_flags: <defaults>
</compile_context>

<pallas_src>
import math

import jax
import jax.numpy as jnp
from jax.experimental import pallas as pl
from jax.experimental.pallas import tpu as pltpu


# ----------------------------------------------------------------------------
# Kernel
# ----------------------------------------------------------------------------
def _make_ppo_kernel(*, epsilon, value_clip_range, rows, lanes,
                     blocks_per_core, tail_start_block, total_valid,
                     has_tail, has_pmask, has_vmask):
    """Build a PPO partial-sum kernel specialized on static config."""

    def kernel(*refs):
        pi_old_ref, pi_ref, adv_ref, vold_ref, v_ref, ret_ref = refs[:6]
        idx = 6
        pmask_ref = None
        vmask_ref = None
        if has_pmask:
            pmask_ref = refs[idx]
            idx += 1
        if has_vmask:
            vmask_ref = refs[idx]
            idx += 1
        out_ref = refs[idx]  # SMEM (1, 6) f32 partial-sum row for this core

        c = pl.program_id(0)      # core-split axis ("parallel")
        i = pl.program_id(1)      # block axis ("arbitrary", accumulated)

        # Zero this core's accumulator row at the start of its block sweep.
        @pl.when(i == 0)
        def _zero():
            for j in range(6):
                out_ref[0, j] = jnp.float32(0.0)

        f32 = jnp.float32
        # Native-dtype loads, upcast to f32 for the math (precision of
        # pi - pi_old matters for exp of near-equal logprobs).
        pi_old = pi_old_ref[...].astype(f32)
        pi = pi_ref[...].astype(f32)
        adv = adv_ref[...].astype(f32)
        v_old = vold_ref[...].astype(f32)
        v = v_ref[...].astype(f32)
        ret = ret_ref[...].astype(f32)

        pmask = pmask_ref[...].astype(f32) if has_pmask else None
        vmask = vmask_ref[...].astype(f32) if has_vmask else None

        # --- shared elementwise compute (done once per block) ---
        ratios = jnp.exp(pi - pi_old)
        clipped_ratios = jnp.clip(ratios, 1.0 - epsilon, 1.0 + epsilon)
        pl_clipped = -adv * clipped_ratios
        pl_unclipped = -adv * ratios
        policy_elem = jnp.maximum(pl_clipped, pl_unclipped)
        clip_ind = (pl_clipped > pl_unclipped).astype(f32)

        v_clip = jnp.clip(v, v_old - value_clip_range, v_old + value_clip_range)
        value_elem = jnp.maximum((v - ret) ** 2, (v_clip - ret) ** 2)

        def msum(x, m):
            return jnp.sum(x) if m is None else jnp.sum(x * m)

        def accumulate(ratios_valid):
            # Padding elements are exact zeros, so policy/clipfrac/value
            # terms and the (zero-padded) user masks already contribute 0;
            # only the raw ratios sum needs a validity mask in tail blocks.
            out_ref[0, 0] += msum(policy_elem, pmask)   # policy numerator
            out_ref[0, 1] += msum(clip_ind, pmask)      # clipfrac numerator
            out_ref[0, 2] += msum(value_elem, vmask)    # value numerator
            out_ref[0, 3] += msum(ratios, ratios_valid)  # ratios sum
            if has_pmask:
                out_ref[0, 4] += jnp.sum(pmask)          # policy denominator
            if has_vmask:
                out_ref[0, 5] += jnp.sum(vmask)          # value denominator

        if not has_tail:
            # No padding at all: statically elide all validity work.
            accumulate(None)
        else:
            block_idx = c * blocks_per_core + i
            in_tail = block_idx >= tail_start_block

            @pl.when(jnp.logical_not(in_tail))
            def _full_block():
                accumulate(None)

            @pl.when(in_tail)
            def _tail_block():
                row_ids = jax.lax.broadcasted_iota(jnp.int32, (rows, lanes), 0)
                lane_ids = jax.lax.broadcasted_iota(jnp.int32, (rows, lanes), 1)
                flat_idx = (block_idx * rows + row_ids) * lanes + lane_ids
                valid = (flat_idx < total_valid).astype(f32)
                accumulate(valid)

    return kernel


# ----------------------------------------------------------------------------
# Tiling heuristics
# ----------------------------------------------------------------------------
def _choose_tiling(total):
    """Pick (lanes, rows_per_block, num_core_splits, blocks_per_core, rows_padded).

    Minimizes tail padding while keeping tiles lane-dense and <= ~1 MiB f32
    (so 8 double-buffered operands stay well inside the VMEM budget on all
    of v5e / v6e / v7x).
    """
    if total >= 512 * 256:
        lanes = 512
    elif total >= 256 * 32:
        lanes = 256
    else:
        lanes = 128
    rows_needed = -(-total // lanes)                    # ceil
    rows_needed = ((rows_needed + 31) // 32) * 32       # 32-sublane granularity (i8/bf16 safe)
    max_block_rows = 512                                # ~1 MiB f32 per tile
    nblocks = -(-rows_needed // max_block_rows)
    nc = 2 if nblocks >= 2 else 1                       # v7x: shard across both TensorCores
    bpc = -(-nblocks // nc)
    rows = -(-rows_needed // (nc * bpc))
    rows = ((rows + 31) // 32) * 32                     # keep (sublane, lane) tiling legal
    rows_padded = nc * bpc * rows
    return lanes, rows, nc, bpc, rows_padded


# ----------------------------------------------------------------------------
# Wrapper
# ----------------------------------------------------------------------------
def ppo_loss(pi_old_logprobs, pi_logprobs, advantages,
             phi_old_values, phi_values, returns,
             padding_masks=None, value_padding_masks=None,
             *, epsilon=0.1, value_clip_range=0.2, value_coeff=0.1):
    """Returns (loss, policy_loss, value_loss, ratios_mean, clipfrac) as f32 scalars."""
    shape = pi_logprobs.shape
    total = int(math.prod(shape))
    has_pmask = padding_masks is not None
    has_vmask = value_padding_masks is not None

    lanes, rows, nc, bpc, rows_padded = _choose_tiling(total)
    padded_total = rows_padded * lanes
    pad = padded_total - total
    block_elems = rows * lanes
    tail_start_block = total // block_elems   # first block that may contain padding

    def prep(x):
        flat = x.reshape(-1)
        if pad:
            flat = jnp.pad(flat, (0, pad))    # zero padding; excluded in tail blocks
        return flat.reshape(rows_padded, lanes)

    operands = [
        prep(pi_old_logprobs),
        prep(pi_logprobs),
        prep(advantages),
        prep(phi_old_values),
        prep(phi_values),
        prep(returns),
    ]
    if has_pmask:
        operands.append(prep(padding_masks.astype(jnp.int8)))   # 1 B/token
    if has_vmask:
        operands.append(prep(value_padding_masks.astype(jnp.int8)))

    kernel = _make_ppo_kernel(
        epsilon=float(epsilon),
        value_clip_range=float(value_clip_range),
        rows=rows, lanes=lanes, blocks_per_core=bpc,
        tail_start_block=tail_start_block, total_valid=total,
        has_tail=(pad > 0), has_pmask=has_pmask, has_vmask=has_vmask,
    )

    in_specs = [
        pl.BlockSpec((rows, lanes), lambda c, i: (c * bpc + i, 0))
        for _ in operands
    ]
    out_specs = pl.BlockSpec((1, 6), lambda c, i: (c, 0),
                             memory_space=pltpu.MemorySpace.SMEM)

    partials = pl.pallas_call(
        kernel,
        grid=(nc, bpc),
        in_specs=in_specs,
        out_specs=out_specs,
        out_shape=jax.ShapeDtypeStruct((nc, 6), jnp.float32),
        compiler_params=pltpu.CompilerParams(
            dimension_semantics=("parallel", "arbitrary"),
            vmem_limit_bytes=32 * 1024 * 1024,
        ),
    )(*operands)

    # Final cheap combine + divisions in XLA (per-core partial sums -> scalars).
    sums = jnp.sum(partials, axis=0)
    total_f = jnp.float32(total)
    pden = sums[4] if has_pmask else total_f
    vden = sums[5] if has_vmask else total_f
    policy_loss = sums[0] / pden
    clipfrac = sums[1] / pden
    value_loss = 0.5 * sums[2] / vden
    ratios_mean = sums[3] / total_f
    loss = policy_loss + value_loss * value_coeff
    return loss, policy_loss, value_loss, ratios_mean, clipfrac


# ----------------------------------------------------------------------------
# Pure-JAX reference (matches the PyTorch forward)
# ----------------------------------------------------------------------------
def _ppo_loss_ref(pi_old, pi, adv, v_old, v, ret, pmask, vmask,
                  epsilon=0.1, value_clip_range=0.2, value_coeff=0.1):
    ratios = jnp.exp(pi - pi_old)
    clipped_ratios = jnp.clip(ratios, 1.0 - epsilon, 1.0 + epsilon)
    pl_c = -adv * clipped_ratios
    pl_u = -adv * ratios
    clipfrac = (pl_c > pl_u).astype(jnp.float32)
    clipfrac = jnp.sum(clipfrac * pmask) / jnp.sum(pmask)
    policy_loss = jnp.maximum(pl_c, pl_u)
    policy_loss = jnp.sum(policy_loss * pmask) / jnp.sum(pmask)
    v_clip = jnp.clip(v, v_old - value_clip_range, v_old + value_clip_range)
    value_loss = jnp.maximum((v - ret) ** 2, (v_clip - ret) ** 2)
    value_loss = 0.5 * jnp.sum(value_loss * vmask) / jnp.sum(vmask)
    loss = policy_loss + value_loss * value_coeff
    return loss, policy_loss, value_loss, jnp.mean(ratios), clipfrac


if __name__ == "__main__":
    import numpy as np

    key = jax.random.PRNGKey(0)
    B, S = 4, 128  # [batch, seq]
    ks = jax.random.split(key, 8)

    pi_old_logprobs = -jax.random.uniform(ks[0], (B, S), jnp.float32, 0.1, 3.0)
    pi_logprobs = pi_old_logprobs + 0.1 * jax.random.normal(ks[1], (B, S), jnp.float32)
    advantages = jax.random.normal(ks[2], (B, S), jnp.float32)
    phi_old_values = jax.random.normal(ks[3], (B, S), jnp.float32)
    phi_values = phi_old_values + 0.3 * jax.random.normal(ks[4], (B, S), jnp.float32)
    returns = jax.random.normal(ks[5], (B, S), jnp.float32)
    padding_masks = jax.random.uniform(ks[6], (B, S)) > 0.2
    value_padding_masks = jax.random.uniform(ks[7], (B, S)) > 0.2

    ones = jnp.ones((B, S), jnp.float32)
    pmask_f = padding_masks.astype(jnp.float32)
    vmask_f = value_padding_masks.astype(jnp.float32)

    # 1) f32 inputs with boolean masks.
    outs = jax.block_until_ready(
        ppo_loss(pi_old_logprobs, pi_logprobs, advantages,
                 phi_old_values, phi_values, returns,
                 padding_masks, value_padding_masks))
    refs = _ppo_loss_ref(pi_old_logprobs, pi_logprobs, advantages,
                         phi_old_values, phi_values, returns, pmask_f, vmask_f)
    for got, want in zip(outs, refs):
        np.testing.assert_allclose(np.asarray(got), np.asarray(want),
                                   rtol=1e-5, atol=1e-5)

    # 2) f32 inputs, no masks (statically elided mask path).
    outs = jax.block_until_ready(
        ppo_loss(pi_old_logprobs, pi_logprobs, advantages,
                 phi_old_values, phi_values, returns))
    refs = _ppo_loss_ref(pi_old_logprobs, pi_logprobs, advantages,
                         phi_old_values, phi_values, returns, ones, ones)
    for got, want in zip(outs, refs):
        np.testing.assert_allclose(np.asarray(got), np.asarray(want),
                                   rtol=1e-5, atol=1e-5)

    # 3) bf16 inputs streamed natively (upcast to f32 inside the kernel).
    tobf = lambda x: x.astype(jnp.bfloat16)
    outs = jax.block_until_ready(
        ppo_loss(tobf(pi_old_logprobs), tobf(pi_logprobs), tobf(advantages),
                 tobf(phi_old_values), tobf(phi_values), tobf(returns),
                 padding_masks, value_padding_masks))
    refs = _ppo_loss_ref(tobf(pi_old_logprobs).astype(jnp.float32),
                         tobf(pi_logprobs).astype(jnp.float32),
                         tobf(advantages).astype(jnp.float32),
                         tobf(phi_old_values).astype(jnp.float32),
                         tobf(phi_values).astype(jnp.float32),
                         tobf(returns).astype(jnp.float32),
                         pmask_f, vmask_f)
    for got, want in zip(outs, refs):
        np.testing.assert_allclose(np.asarray(got), np.asarray(want),
                                   rtol=1e-4, atol=1e-4)

    print("KERNEL_OK")
</pallas_src>

<mosaic_0001>
module attributes {stable_mosaic.version = 11 : i64} {
  func.func @kernel(%arg0: i32, %arg1: i32, %arg2: memref<32x128xf32, #tpu.memory_space<vmem>>, %arg3: memref<32x128xf32, #tpu.memory_space<vmem>>, %arg4: memref<32x128xf32, #tpu.memory_space<vmem>>, %arg5: memref<32x128xf32, #tpu.memory_space<vmem>>, %arg6: memref<32x128xf32, #tpu.memory_space<vmem>>, %arg7: memref<32x128xf32, #tpu.memory_space<vmem>>, %arg8: memref<32x128xi8, #tpu.memory_space<vmem>>, %arg9: memref<32x128xi8, #tpu.memory_space<vmem>>, %arg10: memref<1x6xf32, #tpu.memory_space<smem>>) attributes {dimension_semantics = [#tpu.dimension_semantics<parallel>, #tpu.dimension_semantics<arbitrary>], iteration_bounds = array<i64: 1, 1>, scalar_prefetch = 0 : i64, scratch_operands = 0 : i64, tpu.core_type = #tpu.core_type<tc>, window_params = [{transform_indices = @transform_0, window_bounds = array<i64: 32, 128>}, {transform_indices = @transform_1, window_bounds = array<i64: 32, 128>}, {transform_indices = @transform_2, window_bounds = array<i64: 32, 128>}, {transform_indices = @transform_3, window_bounds = array<i64: 32, 128>}, {transform_indices = @transform_4, window_bounds = array<i64: 32, 128>}, {transform_indices = @transform_5, window_bounds = array<i64: 32, 128>}, {transform_indices = @transform_6, window_bounds = array<i64: 32, 128>}, {transform_indices = @transform_7, window_bounds = array<i64: 32, 128>}, {transform_indices = @transform_8, window_bounds = array<i64: 1, 6>}]} {
    %c0_i32 = arith.constant 0 : i32
    %0 = arith.cmpi eq, %arg1, %c0_i32 : i32
    %1 = arith.extui %0 : i1 to i32
    %c0_i32_0 = arith.constant 0 : i32
    %2 = arith.cmpi ne, %1, %c0_i32_0 : i32
    scf.if %2 {
      %cst_24 = arith.constant 0.000000e+00 : f32
      %c0_25 = arith.constant 0 : index
      %c0_26 = arith.constant 0 : index
      %48 = memref.load %arg10[%c0_25, %c0_26] : memref<1x6xf32, #tpu.memory_space<smem>>
      memref.store %cst_24, %arg10[%c0_25, %c0_26] : memref<1x6xf32, #tpu.memory_space<smem>>
      %cst_27 = arith.constant 0.000000e+00 : f32
      %c0_28 = arith.constant 0 : index
      %c1 = arith.constant 1 : index
      %49 = memref.load %arg10[%c0_28, %c1] : memref<1x6xf32, #tpu.memory_space<smem>>
      memref.store %cst_27, %arg10[%c0_28, %c1] : memref<1x6xf32, #tpu.memory_space<smem>>
      %cst_29 = arith.constant 0.000000e+00 : f32
      %c0_30 = arith.constant 0 : index
      %c2 = arith.constant 2 : index
      %50 = memref.load %arg10[%c0_30, %c2] : memref<1x6xf32, #tpu.memory_space<smem>>
      memref.store %cst_29, %arg10[%c0_30, %c2] : memref<1x6xf32, #tpu.memory_space<smem>>
      %cst_31 = arith.constant 0.000000e+00 : f32
      %c0_32 = arith.constant 0 : index
      %c3 = arith.constant 3 : index
      %51 = memref.load %arg10[%c0_32, %c3] : memref<1x6xf32, #tpu.memory_space<smem>>
      memref.store %cst_31, %arg10[%c0_32, %c3] : memref<1x6xf32, #tpu.memory_space<smem>>
      %cst_33 = arith.constant 0.000000e+00 : f32
      %c0_34 = arith.constant 0 : index
      %c4 = arith.constant 4 : index
      %52 = memref.load %arg10[%c0_34, %c4] : memref<1x6xf32, #tpu.memory_space<smem>>
      memref.store %cst_33, %arg10[%c0_34, %c4] : memref<1x6xf32, #tpu.memory_space<smem>>
      %cst_35 = arith.constant 0.000000e+00 : f32
      %c0_36 = arith.constant 0 : index
      %c5 = arith.constant 5 : index
      %53 = memref.load %arg10[%c0_36, %c5] : memref<1x6xf32, #tpu.memory_space<smem>>
      memref.store %cst_35, %arg10[%c0_36, %c5] : memref<1x6xf32, #tpu.memory_space<smem>>
    } else {
    }
    %c0 = arith.constant 0 : index
    %c0_1 = arith.constant 0 : index
    %3 = vector.load %arg2[%c0, %c0_1] : memref<32x128xf32, #tpu.memory_space<vmem>>, vector<32x128xf32>
    %c0_2 = arith.constant 0 : index
    %c0_3 = arith.constant 0 : index
    %4 = vector.load %arg3[%c0_2, %c0_3] : memref<32x128xf32, #tpu.memory_space<vmem>>, vector<32x128xf32>
    %c0_4 = arith.constant 0 : index
    %c0_5 = arith.constant 0 : index
    %5 = vector.load %arg4[%c0_4, %c0_5] : memref<32x128xf32, #tpu.memory_space<vmem>>, vector<32x128xf32>
    %c0_6 = arith.constant 0 : index
    %c0_7 = arith.constant 0 : index
    %6 = vector.load %arg5[%c0_6, %c0_7] : memref<32x128xf32, #tpu.memory_space<vmem>>, vector<32x128xf32>
    %c0_8 = arith.constant 0 : index
    %c0_9 = arith.constant 0 : index
    %7 = vector.load %arg6[%c0_8, %c0_9] : memref<32x128xf32, #tpu.memory_space<vmem>>, vector<32x128xf32>
    %c0_10 = arith.constant 0 : index
    %c0_11 = arith.constant 0 : index
    %8 = vector.load %arg7[%c0_10, %c0_11] : memref<32x128xf32, #tpu.memory_space<vmem>>, vector<32x128xf32>
    %c0_12 = arith.constant 0 : index
    %c0_13 = arith.constant 0 : index
    %9 = vector.load %arg8[%c0_12, %c0_13] : memref<32x128xi8, #tpu.memory_space<vmem>>, vector<32x128xi8>
    %10 = arith.sitofp %9 : vector<32x128xi8> to vector<32x128xf32>
    %c0_14 = arith.constant 0 : index
    %c0_15 = arith.constant 0 : index
    %11 = vector.load %arg9[%c0_14, %c0_15] : memref<32x128xi8, #tpu.memory_space<vmem>>, vector<32x128xi8>
    %12 = arith.sitofp %11 : vector<32x128xi8> to vector<32x128xf32>
    %13 = arith.subf %4, %3 : vector<32x128xf32>
    %14 = math.exp %13 : vector<32x128xf32>
    %cst = arith.constant 0.899999976 : f32
    %cst_16 = arith.constant 1.100000e+00 : f32
    %15 = vector.broadcast %cst : f32 to vector<32x128xf32>
    %16 = arith.maximumf %15, %14 : vector<32x128xf32>
    %17 = vector.broadcast %cst_16 : f32 to vector<32x128xf32>
    %18 = arith.minimumf %17, %16 : vector<32x128xf32>
    %cst_17 = arith.constant 0.000000e+00 : f32
    %19 = vector.broadcast %cst_17 : f32 to vector<32x128xf32>
    %20 = arith.subf %19, %5 : vector<32x128xf32>
    %21 = arith.mulf %20, %18 : vector<32x128xf32>
    %cst_18 = arith.constant 0.000000e+00 : f32
    %22 = vector.broadcast %cst_18 : f32 to vector<32x128xf32>
    %23 = arith.subf %22, %5 : vector<32x128xf32>
    %24 = arith.mulf %23, %14 : vector<32x128xf32>
    %25 = arith.maximumf %21, %24 : vector<32x128xf32>
    %26 = arith.cmpf ogt, %21, %24 : vector<32x128xf32>
    %27 = arith.extui %26 : vector<32x128xi1> to vector<32x128xi32>
    %28 = arith.sitofp %27 : vector<32x128xi32> to vector<32x128xf32>
    %cst_19 = arith.constant 2.000000e-01 : f32
    %29 = vector.broadcast %cst_19 : f32 to vector<32x128xf32>
    %30 = arith.subf %6, %29 : vector<32x128xf32>
    %cst_20 = arith.constant 2.000000e-01 : f32
    %31 = vector.broadcast %cst_20 : f32 to vector<32x128xf32>
    %32 = arith.addf %6, %31 : vector<32x128xf32>
    %33 = arith.maximumf %30, %7 : vector<32x128xf32>
    %34 = arith.minimumf %32, %33 : vector<32x128xf32>
    %35 = arith.subf %7, %8 : vector<32x128xf32>
    %36 = arith.mulf %35, %35 : vector<32x128xf32>
    %37 = arith.subf %34, %8 : vector<32x128xf32>
    %38 = arith.mulf %37, %37 : vector<32x128xf32>
    %39 = arith.maximumf %36, %38 : vector<32x128xf32>
    %c1_i32 = arith.constant 1 : i32
    %40 = arith.muli %arg0, %c1_i32 : i32
    %41 = arith.addi %40, %arg1 : i32
    %c0_i32_21 = arith.constant 0 : i32
    %42 = arith.cmpi sge, %41, %c0_i32_21 : i32
    %true = arith.constant true
    %43 = arith.xori %42, %true : i1
    %44 = arith.extui %43 : i1 to i32
    %c0_i32_22 = arith.constant 0 : i32
    %45 = arith.cmpi ne, %44, %c0_i32_22 : i32
    scf.if %45 {
      %c0_24 = arith.constant 0 : index
      %c0_25 = arith.constant 0 : index
      %48 = memref.load %arg10[%c0_24, %c0_25] : memref<1x6xf32, #tpu.memory_space<smem>>
      %49 = arith.mulf %25, %10 : vector<32x128xf32>
      %50 = vector.shape_cast %49 : vector<32x128xf32> to vector<1x32x128xf32>
      %cst_26 = arith.constant dense<0.000000e+00> : vector<1xf32>
      %51 = vector.multi_reduction <add>, %50, %cst_26 [1, 2] : vector<1x32x128xf32> to vector<1xf32>
      %52 = vector.shape_cast %51 : vector<1xf32> to vector<1x1x1xf32>
      %53 = vector.extract %52[0, 0, 0] : f32 from vector<1x1x1xf32>
      %54 = arith.addf %48, %53 : f32
      %c0_27 = arith.constant 0 : index
      %c0_28 = arith.constant 0 : index
      %55 = memref.load %arg10[%c0_27, %c0_28] : memref<1x6xf32, #tpu.memory_space<smem>>
      memref.store %54, %arg10[%c0_27, %c0_28] : memref<1x6xf32, #tpu.memory_space<smem>>
      %c0_29 = arith.constant 0 : index
      %c1 = arith.constant 1 : index
      %56 = memref.load %arg10[%c0_29, %c1] : memref<1x6xf32, #tpu.memory_space<smem>>
      %57 = arith.mulf %28, %10 : vector<32x128xf32>
      %58 = vector.shape_cast %57 : vector<32x128xf32> to vector<1x32x128xf32>
      %cst_30 = arith.constant dense<0.000000e+00> : vector<1xf32>
      %59 = vector.multi_reduction <add>, %58, %cst_30 [1, 2] : vector<1x32x128xf32> to vector<1xf32>
      %60 = vector.shape_cast %59 : vector<1xf32> to vector<1x1x1xf32>
      %61 = vector.extract %60[0, 0, 0] : f32 from vector<1x1x1xf32>
      %62 = arith.addf %56, %61 : f32
      %c0_31 = arith.constant 0 : index
      %c1_32 = arith.constant 1 : index
      %63 = memref.load %arg10[%c0_31, %c1_32] : memref<1x6xf32, #tpu.memory_space<smem>>
      memref.store %62, %arg10[%c0_31, %c1_32] : memref<1x6xf32, #tpu.memory_space<smem>>
      %c0_33 = arith.constant 0 : index
      %c2 = arith.constant 2 : index
      %64 = memref.load %arg10[%c0_33, %c2] : memref<1x6xf32, #tpu.memory_space<smem>>
      %65 = arith.mulf %39, %12 : vector<32x128xf32>
      %66 = vector.shape_cast %65 : vector<32x128xf32> to vector<1x32x128xf32>
      %cst_34 = arith.constant dense<0.000000e+00> : vector<1xf32>
      %67 = vector.multi_reduction <add>, %66, %cst_34 [1, 2] : vector<1x32x128xf32> to vector<1xf32>
      %68 = vector.shape_cast %67 : vector<1xf32> to vector<1x1x1xf32>
      %69 = vector.extract %68[0, 0, 0] : f32 from vector<1x1x1xf32>
      %70 = arith.addf %64, %69 : f32
      %c0_35 = arith.constant 0 : index
      %c2_36 = arith.constant 2 : index
      %71 = memref.load %arg10[%c0_35, %c2_36] : memref<1x6xf32, #tpu.memory_space<smem>>
      memref.store %70, %arg10[%c0_35, %c2_36] : memref<1x6xf32, #tpu.memory_space<smem>>
      %c0_37 = arith.constant 0 : index
      %c3 = arith.constant 3 : index
      %72 = memref.load %arg10[%c0_37, %c3] : memref<1x6xf32, #tpu.memory_space<smem>>
      %73 = vector.shape_cast %14 : vector<32x128xf32> to vector<1x32x128xf32>
      %cst_38 = arith.constant dense<0.000000e+00> : vector<1xf32>
      %74 = vector.multi_reduction <add>, %73, %cst_38 [1, 2] : vector<1x32x128xf32> to vector<1xf32>
      %75 = vector.shape_cast %74 : vector<1xf32> to vector<1x1x1xf32>
      %76 = vector.extract %75[0, 0, 0] : f32 from vector<1x1x1xf32>
      %77 = arith.addf %72, %76 : f32
      %c0_39 = arith.constant 0 : index
      %c3_40 = arith.constant 3 : index
      %78 = memref.load %arg10[%c0_39, %c3_40] : memref<1x6xf32, #tpu.memory_space<smem>>
      memref.store %77, %arg10[%c0_39, %c3_40] : memref<1x6xf32, #tpu.memory_space<smem>>
      %c0_41 = arith.constant 0 : index
      %c4 = arith.constant 4 : index
      %79 = memref.load %arg10[%c0_41, %c4] : memref<1x6xf32, #tpu.memory_space<smem>>
      %80 = vector.shape_cast %10 : vector<32x128xf32> to vector<1x32x128xf32>
      %cst_42 = arith.constant dense<0.000000e+00> : vector<1xf32>
      %81 = vector.multi_reduction <add>, %80, %cst_42 [1, 2] : vector<1x32x128xf32> to vector<1xf32>
      %82 = vector.shape_cast %81 : vector<1xf32> to vector<1x1x1xf32>
      %83 = vector.extract %82[0, 0, 0] : f32 from vector<1x1x1xf32>
      %84 = arith.addf %79, %83 : f32
      %c0_43 = arith.constant 0 : index
      %c4_44 = arith.constant 4 : index
      %85 = memref.load %arg10[%c0_43, %c4_44] : memref<1x6xf32, #tpu.memory_space<smem>>
      memref.store %84, %arg10[%c0_43, %c4_44] : memref<1x6xf32, #tpu.memory_space<smem>>
      %c0_45 = arith.constant 0 : index
      %c5 = arith.constant 5 : index
      %86 = memref.load %arg10[%c0_45, %c5] : memref<1x6xf32, #tpu.memory_space<smem>>
      %87 = vector.shape_cast %12 : vector<32x128xf32> to vector<1x32x128xf32>
      %cst_46 = arith.constant dense<0.000000e+00> : vector<1xf32>
      %88 = vector.multi_reduction <add>, %87, %cst_46 [1, 2] : vector<1x32x128xf32> to vector<1xf32>
      %89 = vector.shape_cast %88 : vector<1xf32> to vector<1x1x1xf32>
      %90 = vector.extract %89[0, 0, 0] : f32 from vector<1x1x1xf32>
      %91 = arith.addf %86, %90 : f32
      %c0_47 = arith.constant 0 : index
      %c5_48 = arith.constant 5 : index
      %92 = memref.load %arg10[%c0_47, %c5_48] : memref<1x6xf32, #tpu.memory_space<smem>>
      memref.store %91, %arg10[%c0_47, %c5_48] : memref<1x6xf32, #tpu.memory_space<smem>>
    } else {
    }
    %46 = arith.extui %42 : i1 to i32
    %c0_i32_23 = arith.constant 0 : i32
    %47 = arith.cmpi ne, %46, %c0_i32_23 : i32
    scf.if %47 {
      %48 = tpu.iota {dimensions = array<i32: 0>} : vector<32x128xi32>
      %49 = tpu.iota {dimensions = array<i32: 1>} : vector<32x128xi32>
      %c32_i32 = arith.constant 32 : i32
      %50 = arith.muli %41, %c32_i32 : i32
      %51 = vector.broadcast %50 : i32 to vector<32x128xi32>
      %52 = arith.addi %51, %48 : vector<32x128xi32>
      %c128_i32 = arith.constant 128 : i32
      %53 = vector.broadcast %c128_i32 : i32 to vector<32x128xi32>
      %54 = arith.muli %52, %53 : vector<32x128xi32>
      %55 = arith.addi %54, %49 : vector<32x128xi32>
      %c512_i32 = arith.constant 512 : i32
      %56 = vector.broadcast %c512_i32 : i32 to vector<32x128xi32>
      %57 = arith.cmpi slt, %55, %56 : vector<32x128xi32>
      %58 = arith.extui %57 : vector<32x128xi1> to vector<32x128xi32>
      %59 = arith.sitofp %58 : vector<32x128xi32> to vector<32x128xf32>
      %c0_24 = arith.constant 0 : index
      %c0_25 = arith.constant 0 : index
      %60 = memref.load %arg10[%c0_24, %c0_25] : memref<1x6xf32, #tpu.memory_space<smem>>
      %61 = arith.mulf %25, %10 : vector<32x128xf32>
      %62 = vector.shape_cast %61 : vector<32x128xf32> to vector<1x32x128xf32>
      %cst_26 = arith.constant dense<0.000000e+00> : vector<1xf32>
      %63 = vector.multi_reduction <add>, %62, %cst_26 [1, 2] : vector<1x32x128xf32> to vector<1xf32>
      %64 = vector.shape_cast %63 : vector<1xf32> to vector<1x1x1xf32>
      %65 = vector.extract %64[0, 0, 0] : f32 from vector<1x1x1xf32>
      %66 = arith.addf %60, %65 : f32
      %c0_27 = arith.constant 0 : index
      %c0_28 = arith.constant 0 : index
      %67 = memref.load %arg10[%c0_27, %c0_28] : memref<1x6xf32, #tpu.memory_space<smem>>
      memref.store %66, %arg10[%c0_27, %c0_28] : memref<1x6xf32, #tpu.memory_space<smem>>
      %c0_29 = arith.constant 0 : index
      %c1 = arith.constant 1 : index
      %68 = memref.load %arg10[%c0_29, %c1] : memref<1x6xf32, #tpu.memory_space<smem>>
      %69 = arith.mulf %28, %10 : vector<32x128xf32>
      %70 = vector.shape_cast %69 : vector<32x128xf32> to vector<1x32x128xf32>
      %cst_30 = arith.constant dense<0.000000e+00> : vector<1xf32>
      %71 = vector.multi_reduction <add>, %70, %cst_30 [1, 2] : vector<1x32x128xf32> to vector<1xf32>
      %72 = vector.shape_cast %71 : vector<1xf32> to vector<1x1x1xf32>
      %73 = vector.extract %72[0, 0, 0] : f32 from vector<1x1x1xf32>
      %74 = arith.addf %68, %73 : f32
      %c0_31 = arith.constant 0 : index
      %c1_32 = arith.constant 1 : index
      %75 = memref.load %arg10[%c0_31, %c1_32] : memref<1x6xf32, #tpu.memory_space<smem>>
      memref.store %74, %arg10[%c0_31, %c1_32] : memref<1x6xf32, #tpu.memory_space<smem>>
      %c0_33 = arith.constant 0 : index
      %c2 = arith.constant 2 : index
      %76 = memref.load %arg10[%c0_33, %c2] : memref<1x6xf32, #tpu.memory_space<smem>>
      %77 = arith.mulf %39, %12 : vector<32x128xf32>
      %78 = vector.shape_cast %77 : vector<32x128xf32> to vector<1x32x128xf32>
      %cst_34 = arith.constant dense<0.000000e+00> : vector<1xf32>
      %79 = vector.multi_reduction <add>, %78, %cst_34 [1, 2] : vector<1x32x128xf32> to vector<1xf32>
      %80 = vector.shape_cast %79 : vector<1xf32> to vector<1x1x1xf32>
      %81 = vector.extract %80[0, 0, 0] : f32 from vector<1x1x1xf32>
      %82 = arith.addf %76, %81 : f32
      %c0_35 = arith.constant 0 : index
      %c2_36 = arith.constant 2 : index
      %83 = memref.load %arg10[%c0_35, %c2_36] : memref<1x6xf32, #tpu.memory_space<smem>>
      memref.store %82, %arg10[%c0_35, %c2_36] : memref<1x6xf32, #tpu.memory_space<smem>>
      %c0_37 = arith.constant 0 : index
      %c3 = arith.constant 3 : index
      %84 = memref.load %arg10[%c0_37, %c3] : memref<1x6xf32, #tpu.memory_space<smem>>
      %85 = arith.mulf %14, %59 : vector<32x128xf32>
      %86 = vector.shape_cast %85 : vector<32x128xf32> to vector<1x32x128xf32>
      %cst_38 = arith.constant dense<0.000000e+00> : vector<1xf32>
      %87 = vector.multi_reduction <add>, %86, %cst_38 [1, 2] : vector<1x32x128xf32> to vector<1xf32>
      %88 = vector.shape_cast %87 : vector<1xf32> to vector<1x1x1xf32>
      %89 = vector.extract %88[0, 0, 0] : f32 from vector<1x1x1xf32>
      %90 = arith.addf %84, %89 : f32
      %c0_39 = arith.constant 0 : index
      %c3_40 = arith.constant 3 : index
      %91 = memref.load %arg10[%c0_39, %c3_40] : memref<1x6xf32, #tpu.memory_space<smem>>
      memref.store %90, %arg10[%c0_39, %c3_40] : memref<1x6xf32, #tpu.memory_space<smem>>
      %c0_41 = arith.constant 0 : index
      %c4 = arith.constant 4 : index
      %92 = memref.load %arg10[%c0_41, %c4] : memref<1x6xf32, #tpu.memory_space<smem>>
      %93 = vector.shape_cast %10 : vector<32x128xf32> to vector<1x32x128xf32>
      %cst_42 = arith.constant dense<0.000000e+00> : vector<1xf32>
      %94 = vector.multi_reduction <add>, %93, %cst_42 [1, 2] : vector<1x32x128xf32> to vector<1xf32>
      %95 = vector.shape_cast %94 : vector<1xf32> to vector<1x1x1xf32>
      %96 = vector.extract %95[0, 0, 0] : f32 from vector<1x1x1xf32>
      %97 = arith.addf %92, %96 : f32
      %c0_43 = arith.constant 0 : index
      %c4_44 = arith.constant 4 : index
      %98 = memref.load %arg10[%c0_43, %c4_44] : memref<1x6xf32, #tpu.memory_space<smem>>
      memref.store %97, %arg10[%c0_43, %c4_44] : memref<1x6xf32, #tpu.memory_space<smem>>
      %c0_45 = arith.constant 0 : index
      %c5 = arith.constant 5 : index
      %99 = memref.load %arg10[%c0_45, %c5] : memref<1x6xf32, #tpu.memory_space<smem>>
      %100 = vector.shape_cast %12 : vector<32x128xf32> to vector<1x32x128xf32>
      %cst_46 = arith.constant dense<0.000000e+00> : vector<1xf32>
      %101 = vector.multi_reduction <add>, %100, %cst_46 [1, 2] : vector<1x32x128xf32> to vector<1xf32>
      %102 = vector.shape_cast %101 : vector<1xf32> to vector<1x1x1xf32>
      %103 = vector.extract %102[0, 0, 0] : f32 from vector<1x1x1xf32>
      %104 = arith.addf %99, %103 : f32
      %c0_47 = arith.constant 0 : index
      %c5_48 = arith.constant 5 : index
      %105 = memref.load %arg10[%c0_47, %c5_48] : memref<1x6xf32, #tpu.memory_space<smem>>
      memref.store %104, %arg10[%c0_47, %c5_48] : memref<1x6xf32, #tpu.memory_space<smem>>
    } else {
    }
    return
  }
  func.func @transform_0(%arg0: i32, %arg1: i32) -> (i32, i32) {
    %c1_i32 = arith.constant 1 : i32
    %0 = arith.muli %arg0, %c1_i32 : i32
    %1 = arith.addi %0, %arg1 : i32
    %c0_i32 = arith.constant 0 : i32
    %c0_i32_0 = arith.constant 0 : i32
    return %1, %c0_i32 : i32, i32
  }
  func.func @transform_1(%arg0: i32, %arg1: i32) -> (i32, i32) {
    %c1_i32 = arith.constant 1 : i32
    %0 = arith.muli %arg0, %c1_i32 : i32
    %1 = arith.addi %0, %arg1 : i32
    %c0_i32 = arith.constant 0 : i32
    %c0_i32_0 = arith.constant 0 : i32
    return %1, %c0_i32 : i32, i32
  }
  func.func @transform_2(%arg0: i32, %arg1: i32) -> (i32, i32) {
    %c1_i32 = arith.constant 1 : i32
    %0 = arith.muli %arg0, %c1_i32 : i32
    %1 = arith.addi %0, %arg1 : i32
    %c0_i32 = arith.constant 0 : i32
    %c0_i32_0 = arith.constant 0 : i32
    return %1, %c0_i32 : i32, i32
  }
  func.func @transform_3(%arg0: i32, %arg1: i32) -> (i32, i32) {
    %c1_i32 = arith.constant 1 : i32
    %0 = arith.muli %arg0, %c1_i32 : i32
    %1 = arith.addi %0, %arg1 : i32
    %c0_i32 = arith.constant 0 : i32
    %c0_i32_0 = arith.constant 0 : i32
    return %1, %c0_i32 : i32, i32
  }
  func.func @transform_4(%arg0: i32, %arg1: i32) -> (i32, i32) {
    %c1_i32 = arith.constant 1 : i32
    %0 = arith.muli %arg0, %c1_i32 : i32
    %1 = arith.addi %0, %arg1 : i32
    %c0_i32 = arith.constant 0 : i32
    %c0_i32_0 = arith.constant 0 : i32
    return %1, %c0_i32 : i32, i32
  }
  func.func @transform_5(%arg0: i32, %arg1: i32) -> (i32, i32) {
    %c1_i32 = arith.constant 1 : i32
    %0 = arith.muli %arg0, %c1_i32 : i32
    %1 = arith.addi %0, %arg1 : i32
    %c0_i32 = arith.constant 0 : i32
    %c0_i32_0 = arith.constant 0 : i32
    return %1, %c0_i32 : i32, i32
  }
  func.func @transform_6(%arg0: i32, %arg1: i32) -> (i32, i32) {
    %c1_i32 = arith.constant 1 : i32
    %0 = arith.muli %arg0, %c1_i32 : i32
    %1 = arith.addi %0, %arg1 : i32
    %c0_i32 = arith.constant 0 : i32
    %c0_i32_0 = arith.constant 0 : i32
    return %1, %c0_i32 : i32, i32
  }
  func.func @transform_7(%arg0: i32, %arg1: i32) -> (i32, i32) {
    %c1_i32 = arith.constant 1 : i32
    %0 = arith.muli %arg0, %c1_i32 : i32
    %1 = arith.addi %0, %arg1 : i32
    %c0_i32 = arith.constant 0 : i32
    %c0_i32_0 = arith.constant 0 : i32
    return %1, %c0_i32 : i32, i32
  }
  func.func @transform_8(%arg0: i32, %arg1: i32) -> (i32, i32) {
    %c0_i32 = arith.constant 0 : i32
    %c0_i32_0 = arith.constant 0 : i32
    return %arg0, %c0_i32 : i32, i32
  }
}

</mosaic_0001>

<llo_original>
// kernel: tpu_custom_call.1
$region0: #{tpu_custom_call.1}
  #allocation0 [shape = 'u32[]', space=smem, size = 0x4, offset = 0x4, fixed_abs, tag = 'smem constant byte address 0x4 - core index']
  #allocation1 [shape = 'u32[144,128]{1,0:T(1,128)}', space=vmem, size = 0x12000, scoped, tag = 'internal scratch']
  %s0 = inlined_call_operand.hbm [shape: f32[32,128], index: 0, kind: input, shape index: {}]
  %s1 = inlined_call_operand.hbm [shape: f32[32,128], index: 1, kind: input, shape index: {}]
  %s2 = inlined_call_operand.hbm [shape: f32[32,128], index: 2, kind: input, shape index: {}]
  %s3 = inlined_call_operand.hbm [shape: f32[32,128], index: 3, kind: input, shape index: {}]
  %s4 = inlined_call_operand.hbm [shape: f32[32,128], index: 4, kind: input, shape index: {}]
  %s5 = inlined_call_operand.hbm [shape: f32[32,128], index: 5, kind: input, shape index: {}]
  %s6 = inlined_call_operand.vmem [shape: s8[32,128], index: 6, kind: input, shape index: {}]
  %s7 = inlined_call_operand.vmem [shape: s8[32,128], index: 7, kind: input, shape index: {}]
  %s8 = inlined_call_operand.hbm [shape: f32[1,6], index: 8, kind: output, shape index: {}]
  %s9 = sld [smem:[#allocation0]]
  $region78: #{tpu_custom_call.1} parent=0
    _
  %s11 = ssub.s32 1, %s9
  %s12 = scalar_select 0, %s11, %s9
  $region1: #{tpu_custom_call.1} parent=0
    #allocation2 [shape = 'u8[16384]{0}', space=vmem, size = 0x4000, scoped, tag = 'input window, operand 0, single buffered']
    #allocation3 [shape = 's32[1]{0}', space=sflag, size = 0x4, scoped, tag = 'scoped memory for tpu_custom_call.1']
    #allocation4 [shape = 's32[1]{0}', space=sflag, size = 0x4, scoped, tag = 'scoped memory for tpu_custom_call.1']
    #allocation5 [shape = 'u8[16384]{0}', space=vmem, size = 0x4000, scoped, tag = 'input window, operand 1, single buffered']
    #allocation6 [shape = 's32[1]{0}', space=sflag, size = 0x4, scoped, tag = 'scoped memory for tpu_custom_call.1']
    #allocation7 [shape = 'u8[16384]{0}', space=vmem, size = 0x4000, scoped, tag = 'input window, operand 2, single buffered']
    #allocation8 [shape = 'u8[16384]{0}', space=vmem, size = 0x4000, scoped, tag = 'input window, operand 3, single buffered']
    #allocation9 [shape = 's32[1]{0}', space=sflag, size = 0x4, scoped, tag = 'scoped memory for tpu_custom_call.1']
    #allocation10 [shape = 'u8[16384]{0}', space=vmem, size = 0x4000, scoped, tag = 'input window, operand 4, single buffered']
    #allocation11 [shape = 'u8[16384]{0}', space=vmem, size = 0x4000, scoped, tag = 'input window, operand 5, single buffered']
    #allocation12 [shape = 's32[1]{0}', space=sflag, size = 0x4, scoped, tag = 'scoped memory for tpu_custom_call.1']
    #allocation13 [shape = 'u8[512]{0}', space=smem, size = 0x200, scoped, tag = 'output window, operand 0, single buffered']
    %13 = vsyncpa [#allocation3], 0
    %14 = vsyncpa [#allocation6], 0
    %15 = vsyncpa [#allocation9], 0
    %16 = vsyncpa [#allocation12], 0
    %17 = vsyncpa [#allocation4], 0
    // Predicated region
    $region2: #{tpu_custom_call.1} parent=1 // pred_check
      _
    $region3: #{tpu_custom_call.1} parent=1 // pred_check_branch
      %19 = sbr.rel (0) target = $region5
    $region4: #{tpu_custom_call.1} parent=1 // pred_region
      %s20 = sadd.s32 0, 0
      %s21 = smul.u32 4, %s20
      %s23 = ssub.s32 512, 512
      %24 = vsyncadd [#allocation3], %s23
      %s25 = smul.addr %s21, 128
      %s26 = scalar_lea.hbm %s0, %s25
      %s27 = sshll.u32 [#allocation2], 4
      %s28 = int_to_ptr.vmem [resolvable:$true] %s27
      %33 = dma.hbm_to_vmem [thread:$0]  %s26, 512, %s28, [#allocation3], 128, 128, 8
    $region5: #{tpu_custom_call.1} parent=1 // pred_fallthru
      _
    // Predicated region
    $region6: #{tpu_custom_call.1} parent=1 // pred_check
      _
    $region7: #{tpu_custom_call.1} parent=1 // pred_check_branch
      %35 = sbr.rel (0) target = $region9
    $region8: #{tpu_custom_call.1} parent=1 // pred_region
      %s36 = sadd.s32 0, 0
      %s37 = smul.u32 4, %s36
      %s39 = ssub.s32 512, 512
      %40 = vsyncadd [#allocation6], %s39
      %s41 = smul.addr %s37, 128
      %s42 = scalar_lea.hbm %s1, %s41
      %s43 = sshll.u32 [#allocation5], 4
      %s44 = int_to_ptr.vmem [resolvable:$true] %s43
      %49 = dma.hbm_to_vmem [thread:$0]  %s42, 512, %s44, [#allocation6], 128, 128, 8
    $region9: #{tpu_custom_call.1} parent=1 // pred_fallthru
      _
    // Predicated region
    $region10: #{tpu_custom_call.1} parent=1 // pred_check
      _
    $region11: #{tpu_custom_call.1} parent=1 // pred_check_branch
      %51 = sbr.rel (0) target = $region13
    $region12: #{tpu_custom_call.1} parent=1 // pred_region
      %s52 = sadd.s32 0, 0
      %s53 = smul.u32 4, %s52
      %s55 = ssub.s32 512, 512
      %56 = vsyncadd [#allocation6], %s55
      %s57 = smul.addr %s53, 128
      %s58 = scalar_lea.hbm %s2, %s57
      %s59 = sshll.u32 [#allocation7], 4
      %s60 = int_to_ptr.vmem [resolvable:$true] %s59
      %65 = dma.hbm_to_vmem [thread:$0]  %s58, 512, %s60, [#allocation6], 128, 128, 8
    $region13: #{tpu_custom_call.1} parent=1 // pred_fallthru
      _
    // Predicated region
    $region14: #{tpu_custom_call.1} parent=1 // pred_check
      _
    $region15: #{tpu_custom_call.1} parent=1 // pred_check_branch
      %67 = sbr.rel (0) target = $region17
    $region16: #{tpu_custom_call.1} parent=1 // pred_region
      %s68 = sadd.s32 0, 0
      %s69 = smul.u32 4, %s68
      %s71 = ssub.s32 512, 512
      %72 = vsyncadd [#allocation9], %s71
      %s73 = smul.addr %s69, 128
      %s74 = scalar_lea.hbm %s3, %s73
      %s75 = sshll.u32 [#allocation8], 4
      %s76 = int_to_ptr.vmem [resolvable:$true] %s75
      %81 = dma.hbm_to_vmem [thread:$0]  %s74, 512, %s76, [#allocation9], 128, 128, 8
    $region17: #{tpu_custom_call.1} parent=1 // pred_fallthru
      _
    // Predicated region
    $region18: #{tpu_custom_call.1} parent=1 // pred_check
      _
    $region19: #{tpu_custom_call.1} parent=1 // pred_check_branch
      %83 = sbr.rel (0) target = $region21
    $region20: #{tpu_custom_call.1} parent=1 // pred_region
      %s84 = sadd.s32 0, 0
      %s85 = smul.u32 4, %s84
      %s87 = ssub.s32 512, 512
      %88 = vsyncadd [#allocation9], %s87
      %s89 = smul.addr %s85, 128
      %s90 = scalar_lea.hbm %s4, %s89
      %s91 = sshll.u32 [#allocation10], 4
      %s92 = int_to_ptr.vmem [resolvable:$true] %s91
      %97 = dma.hbm_to_vmem [thread:$0]  %s90, 512, %s92, [#allocation9], 128, 128, 8
    $region21: #{tpu_custom_call.1} parent=1 // pred_fallthru
      _
    // Predicated region
    $region22: #{tpu_custom_call.1} parent=1 // pred_check
      _
    $region23: #{tpu_custom_call.1} parent=1 // pred_check_branch
      %99 = sbr.rel (0) target = $region25
    $region24: #{tpu_custom_call.1} parent=1 // pred_region
      %s100 = sadd.s32 0, 0
      %s101 = smul.u32 4, %s100
      %s103 = ssub.s32 512, 512
      %104 = vsyncadd [#allocation12], %s103
      %s105 = smul.addr %s101, 128
      %s106 = scalar_lea.hbm %s5, %s105
      %s107 = sshll.u32 [#allocation11], 4
      %s108 = int_to_ptr.vmem [resolvable:$true] %s107
      %113 = dma.hbm_to_vmem [thread:$0]  %s106, 512, %s108, [#allocation12], 128, 128, 8
    $region25: #{tpu_custom_call.1} parent=1 // pred_fallthru
      _
    // Predicated region
    $region26: #{tpu_custom_call.1} parent=1 // pred_check
      _
    $region27: #{tpu_custom_call.1} parent=1 // pred_check_branch
      %115 = sbr.rel (0) target = $region29
    $region28: #{tpu_custom_call.1} parent=1 // pred_region
      %s116 = sadd.s32 0, 0
      %p117 = scmp.lt.s32.totalorder %s116, 0
      %s118 = scalar_select %p117, %s116, 0
      %s119 = smul.addr %s118, 8
      %s120 = scalar_lea.vmem %s6, %s119
      %s121 = sadd.s32 0, 0
    $region29: #{tpu_custom_call.1} parent=1 // pred_fallthru
      _
    // Predicated region
    $region30: #{tpu_custom_call.1} parent=1 // pred_check
      _
    $region31: #{tpu_custom_call.1} parent=1 // pred_check_branch
      %123 = sbr.rel (0) target = $region33
    $region32: #{tpu_custom_call.1} parent=1 // pred_region
      %s124 = sadd.s32 0, 0
      %p125 = scmp.lt.s32.totalorder %s124, 0
      %s126 = scalar_select %p125, %s124, 0
      %s127 = smul.addr %s126, 8
      %s128 = scalar_lea.vmem %s7, %s127
      %s129 = sadd.s32 0, 0
    $region33: #{tpu_custom_call.1} parent=1 // pred_fallthru
      _
    // Predicated region
    $region34: #{tpu_custom_call.1} parent=1 // pred_check
      _
    $region35: #{tpu_custom_call.1} parent=1 // pred_check_branch
      %131 = sbr.rel (0) target = $region37
    $region36: #{tpu_custom_call.1} parent=1 // pred_region
      %132 = dma.done [#allocation3], 512
    $region37: #{tpu_custom_call.1} parent=1 // pred_fallthru
      _
    // Predicated region
    $region38: #{tpu_custom_call.1} parent=1 // pred_check
      _
    $region39: #{tpu_custom_call.1} parent=1 // pred_check_branch
      %134 = sbr.rel (0) target = $region41
    $region40: #{tpu_custom_call.1} parent=1 // pred_region
      %135 = dma.done [#allocation6], 512
    $region41: #{tpu_custom_call.1} parent=1 // pred_fallthru
      _
    // Predicated region
    $region42: #{tpu_custom_call.1} parent=1 // pred_check
      _
    $region43: #{tpu_custom_call.1} parent=1 // pred_check_branch
      %137 = sbr.rel (0) target = $region45
    $region44: #{tpu_custom_call.1} parent=1 // pred_region
      %138 = dma.done [#allocation6], 512
    $region45: #{tpu_custom_call.1} parent=1 // pred_fallthru
      _
    // Predicated region
    $region46: #{tpu_custom_call.1} parent=1 // pred_check
      _
    $region47: #{tpu_custom_call.1} parent=1 // pred_check_branch
      %140 = sbr.rel (0) target = $region49
    $region48: #{tpu_custom_call.1} parent=1 // pred_region
      %141 = dma.done [#allocation9], 512
    $region49: #{tpu_custom_call.1} parent=1 // pred_fallthru
      _
    // Predicated region
    $region50: #{tpu_custom_call.1} parent=1 // pred_check
      _
    $region51: #{tpu_custom_call.1} parent=1 // pred_check_branch
      %143 = sbr.rel (0) target = $region53
    $region52: #{tpu_custom_call.1} parent=1 // pred_region
      %144 = dma.done [#allocation9], 512
    $region53: #{tpu_custom_call.1} parent=1 // pred_fallthru
      _
    // Predicated region
    $region54: #{tpu_custom_call.1} parent=1 // pred_check
      _
    $region55: #{tpu_custom_call.1} parent=1 // pred_check_branch
      %146 = sbr.rel (0) target = $region57
    $region56: #{tpu_custom_call.1} parent=1 // pred_region
      %147 = dma.done [#allocation12], 512
    $region57: #{tpu_custom_call.1} parent=1 // pred_fallthru
      _
    %s148 = sadd.s32 0, 0
    %p149 = scmp.lt.s32.totalorder %s148, 0
    %s150 = scalar_select %p149, %s148, 0
    %s151 = smul.addr %s150, 8
    %s152 = scalar_lea.vmem %s6, %s151
    %s153 = sadd.s32 0, 0
    %p154 = scmp.lt.s32.totalorder %s153, 0
    %s155 = scalar_select %p154, %s153, 0
    %s156 = smul.addr %s155, 8
    %s157 = scalar_lea.vmem %s7, %s156
    %s158 = sadd.s32 0, 0
    %s159 = smul.u32 4, %s158
    %s160 = sadd.s32 0, 0
    %s161 = smul.u32 4, %s160
    %s162 = sadd.s32 0, 0
    %s163 = smul.u32 4, %s162
    %s164 = sadd.s32 0, 0
    %s165 = smul.u32 4, %s164
    %s166 = sadd.s32 0, 0
    %s167 = smul.u32 4, %s166
    %s168 = sadd.s32 0, 0
    %s169 = smul.u32 4, %s168
    %s170 = sadd.s32 0, 0
    %p171 = scmp.lt.s32.totalorder %s170, 0
    %s172 = scalar_select %p171, %s170, 0
    %s173 = smul.addr %s172, 8
    %s174 = scalar_lea.vmem %s6, %s173
    %s175 = sadd.s32 0, 0
    %s176 = sadd.s32 0, 0
    %p177 = scmp.lt.s32.totalorder %s176, 0
    %s178 = scalar_select %p177, %s176, 0
    %s179 = smul.addr %s178, 8
    %s180 = scalar_lea.vmem %s7, %s179
    %s181 = sadd.s32 0, 0
    %p182 = scmp.eq.s32.totalorder 0, 0
    // Predicated region
    $region58: #{tpu_custom_call.1} parent=1 // pred_check
      %p183 = pneg %p182
    $region59: #{tpu_custom_call.1} parent=1 // pred_check_branch
      %185 = sbr.rel (%p183) target = $region61
    $region60: #{tpu_custom_call.1} parent=1 // pred_region
      %s186 = scalar_lea.smem [#allocation13], 0
      %187 = sst [smem:[%s186]] 0.0
      %s188 = scalar_lea.smem [#allocation13], 1
      %189 = sst [smem:[%s188]] 0.0
      %s190 = scalar_lea.smem [#allocation13], 2
      %191 = sst [smem:[%s190]] 0.0
      %s192 = scalar_lea.smem [#allocation13], 3
      %193 = sst [smem:[%s192]] 0.0
      %s194 = scalar_lea.smem [#allocation13], 4
      %195 = sst [smem:[%s194]] 0.0
      %s196 = scalar_lea.smem [#allocation13], 5
      %197 = sst [smem:[%s196]] 0.0
    $region61: #{tpu_custom_call.1} parent=1 // pred_fallthru
      _
    %v198 = vld [vmem:[#allocation2] sm:$0xff]
    %v199 = vld [vmem:[#allocation2 + $0x8] sm:$0xff]
    %v200 = vld [vmem:[#allocation2 + $0x10] sm:$0xff]
    %v201 = vld [vmem:[#allocation2 + $0x18] sm:$0xff]
    %v202 = vld [vmem:[#allocation5] sm:$0xff]
    %v203 = vld [vmem:[#allocation5 + $0x8] sm:$0xff]
    %v204 = vld [vmem:[#allocation5 + $0x10] sm:$0xff]
    %v205 = vld [vmem:[#allocation5 + $0x18] sm:$0xff]
    %v206 = vld [vmem:[#allocation7] sm:$0xff]
    %v207 = vld [vmem:[#allocation7 + $0x8] sm:$0xff]
    %v208 = vld [vmem:[#allocation7 + $0x10] sm:$0xff]
    %v209 = vld [vmem:[#allocation7 + $0x18] sm:$0xff]
    %v210 = vld [vmem:[#allocation8] sm:$0xff]
    %v211 = vld [vmem:[#allocation8 + $0x8] sm:$0xff]
    %v212 = vld [vmem:[#allocation8 + $0x10] sm:$0xff]
    %v213 = vld [vmem:[#allocation8 + $0x18] sm:$0xff]
    %v214 = vld [vmem:[#allocation10] sm:$0xff]
    %v215 = vld [vmem:[#allocation10 + $0x8] sm:$0xff]
    %v216 = vld [vmem:[#allocation10 + $0x10] sm:$0xff]
    %v217 = vld [vmem:[#allocation10 + $0x18] sm:$0xff]
    %v218 = vld [vmem:[#allocation11] sm:$0xff]
    %v219 = vld [vmem:[#allocation11 + $0x8] sm:$0xff]
    %v220 = vld [vmem:[#allocation11 + $0x10] sm:$0xff]
    %v221 = vld [vmem:[#allocation11 + $0x18] sm:$0xff]
    %v222 = vld [vmem:[%s174] sm:$0xff]
    %v223 = vunpack.c.0.s8 %v222
    %v224 = vunpack.c.1.s8 %v222
    %v225 = vunpack.c.2.s8 %v222
    %v226 = vunpack.c.3.s8 %v222
    %v227 = vcvt.s32.f32 %v223
    %v228 = vcvt.s32.f32 %v224
    %v229 = vcvt.s32.f32 %v225
    %v230 = vcvt.s32.f32 %v226
    %v231 = vld [vmem:[%s180] sm:$0xff]
    %v232 = vunpack.c.0.s8 %v231
    %v233 = vunpack.c.1.s8 %v231
    %v234 = vunpack.c.2.s8 %v231
    %v235 = vunpack.c.3.s8 %v231
    %v236 = vcvt.s32.f32 %v232
    %v237 = vcvt.s32.f32 %v233
    %v238 = vcvt.s32.f32 %v234
    %v239 = vcvt.s32.f32 %v235
    %v240 = vsub.f32 %v202, %v198
    %v241 = vsub.f32 %v203, %v199
    %v242 = vsub.f32 %v204, %v200
    %v243 = vsub.f32 %v205, %v201
    %v244 = vmul.f32 %v240, 1.442695
    %v245 = vpow.pop %v244
    %v246 = vmul.f32 %v241, 1.442695
    %v247 = vpow.pop %v246
    %v248 = vmul.f32 %v242, 1.442695
    %v249 = vpow.pop %v248
    %v250 = vmul.f32 %v243, 1.442695
    %v251 = vpow.pop %v250
    %v252 = vmax.f32 %v245, 0.9
    %v253 = vmax.f32 %v247, 0.9
    %v254 = vmax.f32 %v249, 0.9
    %v255 = vmax.f32 %v251, 0.9
    %v256 = vmin.f32 %v252, 1.1
    %v257 = vmin.f32 %v253, 1.1
    %v258 = vmin.f32 %v254, 1.1
    %v259 = vmin.f32 %v255, 1.1
    %v260 = vsub.f32 0.0, %v206
    %v261 = vsub.f32 0.0, %v207
    %v262 = vsub.f32 0.0, %v208
    %v263 = vsub.f32 0.0, %v209
    %v264 = vmul.f32 %v260, %v256
    %v265 = vmul.f32 %v261, %v257
    %v266 = vmul.f32 %v262, %v258
    %v267 = vmul.f32 %v263, %v259
    %v268 = vmul.f32 %v260, %v245
    %v269 = vmul.f32 %v261, %v247
    %v270 = vmul.f32 %v262, %v249
    %v271 = vmul.f32 %v263, %v251
    %v272 = vmax.f32 %v264, %v268
    %v273 = vmax.f32 %v265, %v269
    %v274 = vmax.f32 %v266, %v270
    %v275 = vmax.f32 %v267, %v271
    %vm276 = vcmp.gt.f32.partialorder %v264, %v268
    %vm277 = vcmp.gt.f32.partialorder %v265, %v269
    %vm278 = vcmp.gt.f32.partialorder %v266, %v270
    %vm279 = vcmp.gt.f32.partialorder %v267, %v271
    %v280 = vsel %vm276, 1, 0
    %v281 = vsel %vm277, 1, 0
    %v282 = vsel %vm278, 1, 0
    %v283 = vsel %vm279, 1, 0
    %v284 = vcvt.s32.f32 %v280
    %v285 = vcvt.s32.f32 %v281
    %v286 = vcvt.s32.f32 %v282
    %v287 = vcvt.s32.f32 %v283
    %v288 = vsub.f32 %v210, 0.2
    %v289 = vsub.f32 %v211, 0.2
    %v290 = vsub.f32 %v212, 0.2
    %v291 = vsub.f32 %v213, 0.2
    %v292 = vadd.f32 %v210, 0.2
    %v293 = vadd.f32 %v211, 0.2
    %v294 = vadd.f32 %v212, 0.2
    %v295 = vadd.f32 %v213, 0.2
    %v296 = vmax.f32 %v288, %v214
    %v297 = vmax.f32 %v289, %v215
    %v298 = vmax.f32 %v290, %v216
    %v299 = vmax.f32 %v291, %v217
    %v300 = vmin.f32 %v292, %v296
    %v301 = vmin.f32 %v293, %v297
    %v302 = vmin.f32 %v294, %v298
    %v303 = vmin.f32 %v295, %v299
    %v304 = vsub.f32 %v214, %v218
    %v305 = vsub.f32 %v215, %v219
    %v306 = vsub.f32 %v216, %v220
    %v307 = vsub.f32 %v217, %v221
    %v308 = vmul.f32 %v304, %v304
    %v309 = vmul.f32 %v305, %v305
    %v310 = vmul.f32 %v306, %v306
    %v311 = vmul.f32 %v307, %v307
    %v312 = vsub.f32 %v300, %v218
    %v313 = vsub.f32 %v301, %v219
    %v314 = vsub.f32 %v302, %v220
    %v315 = vsub.f32 %v303, %v221
    %v316 = vmul.f32 %v312, %v312
    %v317 = vmul.f32 %v313, %v313
    %v318 = vmul.f32 %v314, %v314
    %v319 = vmul.f32 %v315, %v315
    %v320 = vmax.f32 %v308, %v316
    %v321 = vmax.f32 %v309, %v317
    %v322 = vmax.f32 %v310, %v318
    %v323 = vmax.f32 %v311, %v319
    %s324 = sadd.s32 0, 0
    %p325 = scmp.ge.s32.totalorder %s324, 0
    %p326 = scmp.lt.s32.totalorder %s324, 0
    // Predicated region
    $region62: #{tpu_custom_call.1} parent=1 // pred_check
      %p327 = pneg %p326
    $region63: #{tpu_custom_call.1} parent=1 // pred_check_branch
      %329 = sbr.rel (%p327) target = $region65
    $region64: #{tpu_custom_call.1} parent=1 // pred_region
      %s330 = sld [smem:[#allocation13]]
      %v331 = vmul.f32 %v272, %v227
      %v332 = vmul.f32 %v273, %v228
      %v333 = vmul.f32 %v274, %v229
      %v334 = vmul.f32 %v275, %v230
      %v335 = vadd.f32 %v331, %v332
      %v336 = vadd.f32 %v335, %v333
      %v337 = vadd.f32 %v336, %v334
      %338 = vadd.xlane.f32.xlu0 %v337
      %v339 = vpop.xlane.xlu0 %338
      %v340 = vrot.slane %v339, 4
      %v341 = vadd.f32 %v339, %v340
      %v342 = vrot.slane %v341, 2
      %v343 = vadd.f32 %v341, %v342
      %v344 = vrot.slane %v343, 1
      %v345 = vadd.f32 %v343, %v344
      %s346 = vtos %v345
      %s347 = sadd.f32 %s330, %s346
      %s348 = scalar_lea.smem [#allocation13], 0
      %349 = sst [smem:[%s348]] %s347
      %s350 = sld [smem:[#allocation13 + $0x1]]
      %v351 = vmul.f32 %v284, %v227
      %v352 = vmul.f32 %v285, %v228
      %v353 = vmul.f32 %v286, %v229
      %v354 = vmul.f32 %v287, %v230
      %v355 = vadd.f32 %v351, %v352
      %v356 = vadd.f32 %v355, %v353
      %v357 = vadd.f32 %v356, %v354
      %358 = vadd.xlane.f32.xlu0 %v357
      %v359 = vpop.xlane.xlu0 %358
      %v360 = vrot.slane %v359, 4
      %v361 = vadd.f32 %v359, %v360
      %v362 = vrot.slane %v361, 2
      %v363 = vadd.f32 %v361, %v362
      %v364 = vrot.slane %v363, 1
      %v365 = vadd.f32 %v363, %v364
      %s366 = vtos %v365
      %s367 = sadd.f32 %s350, %s366
      %s368 = scalar_lea.smem [#allocation13], 1
      %369 = sst [smem:[%s368]] %s367
      %s370 = sld [smem:[#allocation13 + $0x2]]
      %v371 = vmul.f32 %v320, %v236
      %v372 = vmul.f32 %v321, %v237
      %v373 = vmul.f32 %v322, %v238
      %v374 = vmul.f32 %v323, %v239
      %v375 = vadd.f32 %v371, %v372
      %v376 = vadd.f32 %v375, %v373
      %v377 = vadd.f32 %v376, %v374
      %378 = vadd.xlane.f32.xlu0 %v377
      %v379 = vpop.xlane.xlu0 %378
      %v380 = vrot.slane %v379, 4
      %v381 = vadd.f32 %v379, %v380
      %v382 = vrot.slane %v381, 2
      %v383 = vadd.f32 %v381, %v382
      %v384 = vrot.slane %v383, 1
      %v385 = vadd.f32 %v383, %v384
      %s386 = vtos %v385
      %s387 = sadd.f32 %s370, %s386
      %s388 = scalar_lea.smem [#allocation13], 2
      %389 = sst [smem:[%s388]] %s387
      %s390 = sld [smem:[#allocation13 + $0x3]]
      %v391 = vadd.f32 %v245, %v247
      %v392 = vadd.f32 %v391, %v249
      %v393 = vadd.f32 %v392, %v251
      %394 = vadd.xlane.f32.xlu0 %v393
      %v395 = vpop.xlane.xlu0 %394
      %v396 = vrot.slane %v395, 4
      %v397 = vadd.f32 %v395, %v396
      %v398 = vrot.slane %v397, 2
      %v399 = vadd.f32 %v397, %v398
      %v400 = vrot.slane %v399, 1
      %v401 = vadd.f32 %v399, %v400
      %s402 = vtos %v401
      %s403 = sadd.f32 %s390, %s402
      %s404 = scalar_lea.smem [#allocation13], 3
      %405 = sst [smem:[%s404]] %s403
      %s406 = sld [smem:[#allocation13 + $0x4]]
      %v407 = vadd.f32 %v227, %v228
      %v408 = vadd.f32 %v407, %v229
      %v409 = vadd.f32 %v408, %v230
      %410 = vadd.xlane.f32.xlu0 %v409
      %v411 = vpop.xlane.xlu0 %410
      %v412 = vrot.slane %v411, 4
      %v413 = vadd.f32 %v411, %v412
      %v414 = vrot.slane %v413, 2
      %v415 = vadd.f32 %v413, %v414
      %v416 = vrot.slane %v415, 1
      %v417 = vadd.f32 %v415, %v416
      %s418 = vtos %v417
      %s419 = sadd.f32 %s406, %s418
      %s420 = scalar_lea.smem [#allocation13], 4
      %421 = sst [smem:[%s420]] %s419
      %s422 = sld [smem:[#allocation13 + $0x5]]
      %v423 = vadd.f32 %v236, %v237
      %v424 = vadd.f32 %v423, %v238
      %v425 = vadd.f32 %v424, %v239
      %426 = vadd.xlane.f32.xlu0 %v425
      %v427 = vpop.xlane.xlu0 %426
      %v428 = vrot.slane %v427, 4
      %v429 = vadd.f32 %v427, %v428
      %v430 = vrot.slane %v429, 2
      %v431 = vadd.f32 %v429, %v430
      %v432 = vrot.slane %v431, 1
      %v433 = vadd.f32 %v431, %v432
      %s434 = vtos %v433
      %s435 = sadd.f32 %s422, %s434
      %s436 = scalar_lea.smem [#allocation13], 5
      %437 = sst [smem:[%s436]] %s435
    $region65: #{tpu_custom_call.1} parent=1 // pred_fallthru
      _
    // Predicated region
    $region66: #{tpu_custom_call.1} parent=1 // pred_check
      %p438 = pneg %p325
    $region67: #{tpu_custom_call.1} parent=1 // pred_check_branch
      %440 = sbr.rel (%p438) target = $region69
    $region68: #{tpu_custom_call.1} parent=1 // pred_region
      %v441 = vlaneseq
      %v442 = vshrl.u32 %v441, 7
      %v443 = vadd.s32 %v442, 8
      %v444 = vadd.s32 %v442, 16
      %v445 = vadd.s32 %v442, 24
      %v446 = vlaneseq
      %v447 = vand.u32 %v446, 127
      %s448 = smul.u32 %s324, 32
      %v449 = vstv %s448
      %v450 = vadd.s32 %v449, %v442
      %v451 = vadd.s32 %v449, %v443
      %v452 = vadd.s32 %v449, %v444
      %v453 = vadd.s32 %v449, %v445
      %v454 = vmul.u32 %v450, 128
      %v455 = vmul.u32 %v451, 128
      %v456 = vmul.u32 %v452, 128
      %v457 = vmul.u32 %v453, 128
      %v458 = vadd.s32 %v454, %v447
      %v459 = vadd.s32 %v455, %v447
      %v460 = vadd.s32 %v456, %v447
      %v461 = vadd.s32 %v457, %v447
      %vm462 = vcmp.lt.s32.totalorder %v458, 512
      %vm463 = vcmp.lt.s32.totalorder %v459, 512
      %vm464 = vcmp.lt.s32.totalorder %v460, 512
      %vm465 = vcmp.lt.s32.totalorder %v461, 512
      %v466 = vsel %vm462, 1, 0
      %v467 = vsel %vm463, 1, 0
      %v468 = vsel %vm464, 1, 0
      %v469 = vsel %vm465, 1, 0
      %v470 = vcvt.s32.f32 %v466
      %v471 = vcvt.s32.f32 %v467
      %v472 = vcvt.s32.f32 %v468
      %v473 = vcvt.s32.f32 %v469
      %s474 = sld [smem:[#allocation13]]
      %v475 = vmul.f32 %v272, %v227
      %v476 = vmul.f32 %v273, %v228
      %v477 = vmul.f32 %v274, %v229
      %v478 = vmul.f32 %v275, %v230
      %v479 = vadd.f32 %v475, %v476
      %v480 = vadd.f32 %v479, %v477
      %v481 = vadd.f32 %v480, %v478
      %482 = vadd.xlane.f32.xlu0 %v481
      %v483 = vpop.xlane.xlu0 %482
      %v484 = vrot.slane %v483, 4
      %v485 = vadd.f32 %v483, %v484
      %v486 = vrot.slane %v485, 2
      %v487 = vadd.f32 %v485, %v486
      %v488 = vrot.slane %v487, 1
      %v489 = vadd.f32 %v487, %v488
      %s490 = vtos %v489
      %s491 = sadd.f32 %s474, %s490
      %s492 = scalar_lea.smem [#allocation13], 0
      %493 = sst [smem:[%s492]] %s491
      %s494 = sld [smem:[#allocation13 + $0x1]]
      %v495 = vmul.f32 %v284, %v227
      %v496 = vmul.f32 %v285, %v228
      %v497 = vmul.f32 %v286, %v229
      %v498 = vmul.f32 %v287, %v230
      %v499 = vadd.f32 %v495, %v496
      %v500 = vadd.f32 %v499, %v497
      %v501 = vadd.f32 %v500, %v498
      %502 = vadd.xlane.f32.xlu0 %v501
      %v503 = vpop.xlane.xlu0 %502
      %v504 = vrot.slane %v503, 4
      %v505 = vadd.f32 %v503, %v504
      %v506 = vrot.slane %v505, 2
      %v507 = vadd.f32 %v505, %v506
      %v508 = vrot.slane %v507, 1
      %v509 = vadd.f32 %v507, %v508
      %s510 = vtos %v509
      %s511 = sadd.f32 %s494, %s510
      %s512 = scalar_lea.smem [#allocation13], 1
      %513 = sst [smem:[%s512]] %s511
      %s514 = sld [smem:[#allocation13 + $0x2]]
      %v515 = vmul.f32 %v320, %v236
      %v516 = vmul.f32 %v321, %v237
      %v517 = vmul.f32 %v322, %v238
      %v518 = vmul.f32 %v323, %v239
      %v519 = vadd.f32 %v515, %v516
      %v520 = vadd.f32 %v519, %v517
      %v521 = vadd.f32 %v520, %v518
      %522 = vadd.xlane.f32.xlu0 %v521
      %v523 = vpop.xlane.xlu0 %522
      %v524 = vrot.slane %v523, 4
      %v525 = vadd.f32 %v523, %v524
      %v526 = vrot.slane %v525, 2
      %v527 = vadd.f32 %v525, %v526
      %v528 = vrot.slane %v527, 1
      %v529 = vadd.f32 %v527, %v528
      %s530 = vtos %v529
      %s531 = sadd.f32 %s514, %s530
      %s532 = scalar_lea.smem [#allocation13], 2
      %533 = sst [smem:[%s532]] %s531
      %s534 = sld [smem:[#allocation13 + $0x3]]
      %v535 = vmul.f32 %v245, %v470
      %v536 = vmul.f32 %v247, %v471
      %v537 = vmul.f32 %v249, %v472
      %v538 = vmul.f32 %v251, %v473
      %v539 = vadd.f32 %v535, %v536
      %v540 = vadd.f32 %v539, %v537
      %v541 = vadd.f32 %v540, %v538
      %542 = vadd.xlane.f32.xlu0 %v541
      %v543 = vpop.xlane.xlu0 %542
      %v544 = vrot.slane %v543, 4
      %v545 = vadd.f32 %v543, %v544
      %v546 = vrot.slane %v545, 2
      %v547 = vadd.f32 %v545, %v546
      %v548 = vrot.slane %v547, 1
      %v549 = vadd.f32 %v547, %v548
      %s550 = vtos %v549
      %s551 = sadd.f32 %s534, %s550
      %s552 = scalar_lea.smem [#allocation13], 3
      %553 = sst [smem:[%s552]] %s551
      %s554 = sld [smem:[#allocation13 + $0x4]]
      %v555 = vadd.f32 %v227, %v228
      %v556 = vadd.f32 %v555, %v229
      %v557 = vadd.f32 %v556, %v230
      %558 = vadd.xlane.f32.xlu0 %v557
      %v559 = vpop.xlane.xlu0 %558
      %v560 = vrot.slane %v559, 4
      %v561 = vadd.f32 %v559, %v560
      %v562 = vrot.slane %v561, 2
      %v563 = vadd.f32 %v561, %v562
      %v564 = vrot.slane %v563, 1
      %v565 = vadd.f32 %v563, %v564
      %s566 = vtos %v565
      %s567 = sadd.f32 %s554, %s566
      %s568 = scalar_lea.smem [#allocation13], 4
      %569 = sst [smem:[%s568]] %s567
      %s570 = sld [smem:[#allocation13 + $0x5]]
      %v571 = vadd.f32 %v236, %v237
      %v572 = vadd.f32 %v571, %v238
      %v573 = vadd.f32 %v572, %v239
      %574 = vadd.xlane.f32.xlu0 %v573
      %v575 = vpop.xlane.xlu0 %574
      %v576 = vrot.slane %v575, 4
      %v577 = vadd.f32 %v575, %v576
      %v578 = vrot.slane %v577, 2
      %v579 = vadd.f32 %v577, %v578
      %v580 = vrot.slane %v579, 1
      %v581 = vadd.f32 %v579, %v580
      %s582 = vtos %v581
      %s583 = sadd.f32 %s570, %s582
      %s584 = scalar_lea.smem [#allocation13], 5
      %585 = sst [smem:[%s584]] %s583
    $region69: #{tpu_custom_call.1} parent=1 // pred_fallthru
      _
    // Predicated region
    $region70: #{tpu_custom_call.1} parent=1 // pred_check
      _
    $region71: #{tpu_custom_call.1} parent=1 // pred_check_branch
      %587 = sbr.rel (0) target = $region73
    $region72: #{tpu_custom_call.1} parent=1 // pred_region
      %s589 = ssub.s32 16, 16
      %590 = vsyncadd [#allocation4], %s589
      %593 = dma.smem_to_hbm [#allocation13], 16, %s8, [#allocation4]
    $region73: #{tpu_custom_call.1} parent=1 // pred_fallthru
      _
    // Predicated region
    $region74: #{tpu_custom_call.1} parent=1 // pred_check
      _
    $region75: #{tpu_custom_call.1} parent=1 // pred_check_branch
      %595 = sbr.rel (0) target = $region77
    $region76: #{tpu_custom_call.1} parent=1 // pred_region
      %596 = dma.done [#allocation4], 16
    $region77: #{tpu_custom_call.1} parent=1 // pred_fallthru
      _
    %597 = sfence
    %598 = vsyncpa [#allocation3], 1
    %599 = vsyncpa [#allocation6], 1
    %600 = vsyncpa [#allocation9], 1
    %601 = vsyncpa [#allocation12], 1
    %602 = vsyncpa [#allocation4], 1

</llo_original>
